<compile_context>
chip_gen: v6e
topology: v6e:2x2x1
jax: 0.10.0
libtpu: 0.0.40
codegen_flags: <defaults>
</compile_context>

<pallas_src>
import functools

import jax
import jax.numpy as jnp
from jax import lax
from jax.experimental import pallas as pl
from jax.experimental.pallas import tpu as pltpu


def _round_up(x, m):
    return (x + m - 1) // m * m


def _pick_tile(dim, pref, align):
    """Largest `align`-multiple tile <= pref that divides round_up(dim, align).

    Prefers a divisor (so wrapper-side padding is a no-op) but never shrinks
    below half of `pref`; falls back to `pref` (with padding) otherwise.
    """
    dim_a = _round_up(dim, align)
    pref = max(align, min(_round_up(pref, align), dim_a))
    lo = max(align, pref // 2)
    for t in range(pref, lo - 1, -align):
        if dim_a % t == 0:
            return t
    return pref


def _choose_tiles(M, N, K, tm, tn, tk):
    tm = _pick_tile(M, tm, 8)
    tn = _pick_tile(N, tn, 128)
    tk = _pick_tile(K, tk, 128)

    # Tiny-M (small-batch inference) regime: per-step compute is negligible, so
    # grow the K/N tiles to cut the number of grid steps (weight streams once).
    if tm <= 64:
        tk = _pick_tile(K, max(tk, 2048), 128)
        tn = _pick_tile(N, max(tn, 512), 128)

    # v7x megacore: guarantee >=2 blocks along at least one "parallel" axis so
    # the second TensorCore is not idle. No effect on v5e/v6e (single TC).
    if _round_up(M, tm) // tm == 1 and _round_up(N, tn) // tn == 1 and tn >= 256:
        tn = max(128, (tn // 2) // 128 * 128)

    return tm, tn, tk


def _linear_kernel_accum_out(x_ref, w_ref, b_ref, o_ref):
    """f32 output path: accumulate directly into the resident output block.

    x_ref: (tm, tk) activations
    w_ref: (tn, tk) weight in PyTorch (out, in) layout -> contract K = dim 1
    b_ref: (1, tn)  bias row
    o_ref: (tm, tn) f32 output tile, resident across the K grid axis
    """
    k = pl.program_id(2)

    @pl.when(k == 0)
    def _():
        # Fold the bias in at init; the K-loop then only accumulates.
        o_ref[...] = jnp.broadcast_to(b_ref[...].astype(jnp.float32), o_ref.shape)

    # y_tile += x_tile @ w_tile.T  (MXU-native transposed RHS, no XLU transpose).
    o_ref[...] += lax.dot_general(
        x_ref[...], w_ref[...],
        dimension_numbers=(((1,), (1,)), ((), ())),
        preferred_element_type=jnp.float32,
    )


def _linear_kernel_scratch(x_ref, w_ref, b_ref, o_ref, acc_ref):
    """Generic path for non-f32 outputs: f32 scratch accumulator + epilogue."""
    k = pl.program_id(2)

    @pl.when(k == 0)
    def _():
        acc_ref[...] = jnp.zeros_like(acc_ref)

    acc_ref[...] += lax.dot_general(
        x_ref[...], w_ref[...],
        dimension_numbers=(((1,), (1,)), ((), ())),
        preferred_element_type=jnp.float32,
    )

    @pl.when(k == pl.num_programs(2) - 1)
    def _():
        o_ref[...] = (acc_ref[...] + b_ref[...]).astype(o_ref.dtype)


@functools.partial(jax.jit, static_argnames=("tm", "tn", "tk"))
def projection_forward(x, weight, bias, *, tm=512, tn=512, tk=512):
    """Equivalent to torch.nn.Linear(input_dim, output_dim)(x).

    x:      (batch, input_dim)        float32
    weight: (output_dim, input_dim)   float32  (PyTorch layout, NOT transposed)
    bias:   (output_dim,)             float32
    returns (batch, output_dim)
    """
    M, K = x.shape
    N = weight.shape[0]
    out_dtype = x.dtype

    tm, tn, tk = _choose_tiles(M, N, K, tm, tn, tk)
    Mp, Np, Kp = _round_up(M, tm), _round_up(N, tn), _round_up(K, tk)

    # Pad only for ragged tails (tile picker prefers divisors, so this is a
    # no-op for typical Linear dims). Padded K/N entries are zero -> no effect.
    if (Mp, Kp) != (M, K):
        x = jnp.pad(x, ((0, Mp - M), (0, Kp - K)))
    if (Np, Kp) != (N, K):
        weight = jnp.pad(weight, ((0, Np - N), (0, Kp - K)))
    if Np != N:
        bias = jnp.pad(bias, (0, Np - N))
    b2d = bias.reshape(1, Np)

    grid = (Mp // tm, Np // tn, Kp // tk)

    # Honest traffic estimate: x re-read per N-tile, weight re-read per M-tile.
    cost = pl.CostEstimate(
        flops=2 * Mp * Np * Kp,
        transcendentals=0,
        bytes_accessed=4 * (Mp * Kp * (Np // tn) + Np * Kp * (Mp // tm)
                            + Mp * Np + Np),
    )

    f32_out = out_dtype == jnp.float32
    kernel = _linear_kernel_accum_out if f32_out else _linear_kernel_scratch
    scratch = [] if f32_out else [pltpu.VMEM((tm, tn), jnp.float32)]

    y = pl.pallas_call(
        kernel,
        out_shape=jax.ShapeDtypeStruct((Mp, Np), out_dtype),
        grid_spec=pltpu.PrefetchScalarGridSpec(
            num_scalar_prefetch=0,
            grid=grid,
            in_specs=[
                pl.BlockSpec((tm, tk), lambda i, j, k: (i, k)),   # x
                pl.BlockSpec((tn, tk), lambda i, j, k: (j, k)),   # weight (out, in)
                pl.BlockSpec((1, tn), lambda i, j, k: (0, j)),    # bias row
            ],
            out_specs=pl.BlockSpec((tm, tn), lambda i, j, k: (i, j)),
            scratch_shapes=scratch,
        ),
        compiler_params=pltpu.CompilerParams(
            # M/N independent -> megacore-shardable on v7x; K is the reduction.
            dimension_semantics=("parallel", "parallel", "arbitrary"),
            # Headroom for larger tile configs; stays under v7x's 64 MiB VMEM.
            vmem_limit_bytes=48 * 1024 * 1024,
        ),
        cost_estimate=cost,
    )(x, weight, b2d)

    if (Mp, Np) != (M, N):
        y = y[:M, :N]
    return y


if __name__ == "__main__":
    # Small, module-consistent shapes (nn.Linear(input_dim=32, output_dim=16)).
    batch, input_dim, output_dim = 2, 32, 16

    key = jax.random.PRNGKey(0)
    kx, kw, kb = jax.random.split(key, 3)

    # Deterministic init mimicking nn.Linear's uniform(-1/sqrt(in), 1/sqrt(in)).
    bound = 1.0 / jnp.sqrt(jnp.float32(input_dim))
    weight = jax.random.uniform(kw, (output_dim, input_dim), jnp.float32, -bound, bound)
    bias = jax.random.uniform(kb, (output_dim,), jnp.float32, -bound, bound)
    x = jax.random.normal(kx, (batch, input_dim), jnp.float32)

    y = projection_forward(x, weight, bias)
    jax.block_until_ready(y)

    # Reference check against plain JAX (same math as torch.nn.Linear forward).
    y_ref = x @ weight.T + bias
    assert y.shape == (batch, output_dim)
    assert jnp.allclose(y, y_ref, atol=1e-5, rtol=1e-5)

    # Multi-tile problem: exercises the 3-D grid, the resident f32 output
    # accumulation across K, the bias-at-init path, and the divisor tile picker
    # (tn=384 divides 768 -> no wrapper-side padding of the weight).
    M2, K2, N2 = 512, 1024, 768
    kx2, kw2, kb2 = jax.random.split(jax.random.PRNGKey(1), 3)
    x2 = jax.random.normal(kx2, (M2, K2), jnp.float32)
    w2 = jax.random.normal(kw2, (N2, K2), jnp.float32) * 0.02
    b2 = jax.random.normal(kb2, (N2,), jnp.float32)
    y2 = projection_forward(x2, w2, b2)
    jax.block_until_ready(y2)
    y2_ref = x2 @ w2.T + b2
    assert jnp.allclose(y2, y2_ref, atol=1e-3, rtol=1e-3)

    print("KERNEL_OK")
</pallas_src>

<mosaic_0001>
module attributes {stable_mosaic.version = 11 : i64} {
  func.func @_linear_kernel_accum_out(%arg0: i32, %arg1: i32, %arg2: i32, %arg3: memref<8x128xf32, #tpu.memory_space<vmem>>, %arg4: memref<128x128xf32, #tpu.memory_space<vmem>>, %arg5: memref<1x128xf32, #tpu.memory_space<vmem>>, %arg6: memref<8x128xf32, #tpu.memory_space<vmem>>) attributes {dimension_semantics = [#tpu.dimension_semantics<parallel>, #tpu.dimension_semantics<parallel>, #tpu.dimension_semantics<arbitrary>], iteration_bounds = array<i64: 1, 1, 1>, scalar_prefetch = 0 : i64, scratch_operands = 0 : i64, tpu.core_type = #tpu.core_type<tc>, window_params = [{transform_indices = @transform_0, window_bounds = array<i64: 8, 128>}, {transform_indices = @transform_1, window_bounds = array<i64: 128, 128>}, {transform_indices = @transform_2, window_bounds = array<i64: 1, 128>}, {transform_indices = @transform_3, window_bounds = array<i64: 8, 128>}]} {
    %c0_i32 = arith.constant 0 : i32
    %0 = arith.cmpi eq, %arg2, %c0_i32 : i32
    %1 = arith.extui %0 : i1 to i32
    %c0_i32_0 = arith.constant 0 : i32
    %2 = arith.cmpi ne, %1, %c0_i32_0 : i32
    scf.if %2 {
      %c0_8 = arith.constant 0 : index
      %c0_9 = arith.constant 0 : index
      %9 = vector.load %arg5[%c0_8, %c0_9] : memref<1x128xf32, #tpu.memory_space<vmem>>, vector<1x128xf32>
      %10 = vector.shape_cast %9 : vector<1x128xf32> to vector<1x128xf32>
      %11 = vector.broadcast %10 : vector<1x128xf32> to vector<8x128xf32>
      %c0_10 = arith.constant 0 : index
      %c0_11 = arith.constant 0 : index
      %12 = vector.load %arg6[%c0_10, %c0_11] : memref<8x128xf32, #tpu.memory_space<vmem>>, vector<8x128xf32>
      tpu.vector_store %arg6[%c0_10, %c0_11], %11 {strides = array<i32>} : memref<8x128xf32, #tpu.memory_space<vmem>>, vector<8x128xf32>,
    } else {
    }
    %c0 = arith.constant 0 : index
    %c0_1 = arith.constant 0 : index
    %3 = vector.load %arg6[%c0, %c0_1] : memref<8x128xf32, #tpu.memory_space<vmem>>, vector<8x128xf32>
    %c0_2 = arith.constant 0 : index
    %c0_3 = arith.constant 0 : index
    %4 = vector.load %arg3[%c0_2, %c0_3] : memref<8x128xf32, #tpu.memory_space<vmem>>, vector<8x128xf32>
    %c0_4 = arith.constant 0 : index
    %c0_5 = arith.constant 0 : index
    %5 = vector.load %arg4[%c0_4, %c0_5] : memref<128x128xf32, #tpu.memory_space<vmem>>, vector<128x128xf32>
    %cst = arith.constant dense<0.000000e+00> : vector<8x128xf32>
    %6 = tpu.matmul %4, %5, %cst {dimension_numbers = #tpu.dot_dimension_numbers<[1], [1], [0], [0], [0, 0, 1, 0], [], []>} : vector<8x128xf32>, vector<128x128xf32>, vector<8x128xf32> -> vector<8x128xf32>
    %7 = arith.addf %3, %6 : vector<8x128xf32>
    %c0_6 = arith.constant 0 : index
    %c0_7 = arith.constant 0 : index
    %8 = vector.load %arg6[%c0_6, %c0_7] : memref<8x128xf32, #tpu.memory_space<vmem>>, vector<8x128xf32>
    tpu.vector_store %arg6[%c0_6, %c0_7], %7 {strides = array<i32>} : memref<8x128xf32, #tpu.memory_space<vmem>>, vector<8x128xf32>,
    return
  }
  func.func @transform_0(%arg0: i32, %arg1: i32, %arg2: i32) -> (i32, i32) {
    %c0_i32 = arith.constant 0 : i32
    return %arg0, %arg2 : i32, i32
  }
  func.func @transform_1(%arg0: i32, %arg1: i32, %arg2: i32) -> (i32, i32) {
    %c0_i32 = arith.constant 0 : i32
    return %arg1, %arg2 : i32, i32
  }
  func.func @transform_2(%arg0: i32, %arg1: i32, %arg2: i32) -> (i32, i32) {
    %c0_i32 = arith.constant 0 : i32
    %c0_i32_0 = arith.constant 0 : i32
    return %c0_i32, %arg1 : i32, i32
  }
  func.func @transform_3(%arg0: i32, %arg1: i32, %arg2: i32) -> (i32, i32) {
    %c0_i32 = arith.constant 0 : i32
    return %arg0, %arg1 : i32, i32
  }
}

</mosaic_0001>

<llo_original>
// kernel: projection_forward.1
$region0: #{projection_forward.1}
  #allocation0 [shape = 'u32[]', space=smem, size = 0x4, offset = 0x4, fixed_abs, tag = 'smem constant byte address 0x4 - core index']
  #allocation1 [shape = 'u32[144,128]{1,0:T(1,128)}', space=vmem, size = 0x12000, scoped, tag = 'internal scratch']
  %s0 = inlined_call_operand.vmem [shape: f32[8,128], index: 0, kind: input, shape index: {}]
  %s1 = inlined_call_operand.vmem [shape: f32[128,128], index: 1, kind: input, shape index: {}]
  %s2 = inlined_call_operand.vmem [shape: f32[1,128], index: 2, kind: input, shape index: {}]
  %s3 = inlined_call_operand.vmem [shape: f32[8,128], index: 3, kind: output, shape index: {}]
  %s4 = sld [smem:[#allocation0]]
  $region26: #{projection_forward.1} parent=0
    _
  %s6 = ssub.s32 1, %s4
  %s7 = scalar_select 0, %s6, %s4
  // Predicated region
  $region2: #{projection_forward.1} parent=0 // pred_check
    _
  $region3: #{projection_forward.1} parent=0 // pred_check_branch
    %9 = sbr.rel (0) target = $region5
  $region4: #{projection_forward.1} parent=0 // pred_region
    _
  $region5: #{projection_forward.1} parent=0 // pred_fallthru
    _
  // Predicated region
  $region6: #{projection_forward.1} parent=0 // pred_check
    _
  $region7: #{projection_forward.1} parent=0 // pred_check_branch
    %11 = sbr.rel (0) target = $region9
  $region8: #{projection_forward.1} parent=0 // pred_region
    _
  $region9: #{projection_forward.1} parent=0 // pred_fallthru
    _
  // Predicated region
  $region10: #{projection_forward.1} parent=0 // pred_check
    _
  $region11: #{projection_forward.1} parent=0 // pred_check_branch
    %13 = sbr.rel (0) target = $region13
  $region12: #{projection_forward.1} parent=0 // pred_region
    _
  $region13: #{projection_forward.1} parent=0 // pred_fallthru
    _
  %p14 = scmp.eq.s32.totalorder 0, 0
  // Predicated region
  $region14: #{projection_forward.1} parent=0 // pred_check
    %p15 = pneg %p14
  $region15: #{projection_forward.1} parent=0 // pred_check_branch
    %17 = sbr.rel (%p15) target = $region17
  $region16: #{projection_forward.1} parent=0 // pred_region
    %v18 = vld [vmem:[%s2] sm:$0x1]
    %v20 = vlaneseq
    %v21 = vshrl.u32 %v20, 7
    %v22 = vsub.s32 0, %v21
    %v23 = vrot.slane %v18, %v22
    %25 = vst [vmem:[%s3] sm:$0xff] %v23
  $region17: #{projection_forward.1} parent=0 // pred_fallthru
    _
  %v26 = vld [vmem:[%s3] sm:$0xff]
  %v27 = vld [vmem:[%s0] sm:$0xff]
  %v28 = vld [vmem:[%s1] sm:$0xff]
  %v29 = vld [vmem:[%s1 + $0x8] sm:$0xff]
  %v30 = vld [vmem:[%s1 + $0x10] sm:$0xff]
  %v31 = vld [vmem:[%s1 + $0x18] sm:$0xff]
  %v32 = vld [vmem:[%s1 + $0x20] sm:$0xff]
  %v33 = vld [vmem:[%s1 + $0x28] sm:$0xff]
  %v34 = vld [vmem:[%s1 + $0x30] sm:$0xff]
  %v35 = vld [vmem:[%s1 + $0x38] sm:$0xff]
  %v36 = vld [vmem:[%s1 + $0x40] sm:$0xff]
  %v37 = vld [vmem:[%s1 + $0x48] sm:$0xff]
  %v38 = vld [vmem:[%s1 + $0x50] sm:$0xff]
  %v39 = vld [vmem:[%s1 + $0x58] sm:$0xff]
  %v40 = vld [vmem:[%s1 + $0x60] sm:$0xff]
  %v41 = vld [vmem:[%s1 + $0x68] sm:$0xff]
  %v42 = vld [vmem:[%s1 + $0x70] sm:$0xff]
  %v43 = vld [vmem:[%s1 + $0x78] sm:$0xff]
  %44 = vmatprep.subr.mxu0 0.0
  %45 = vmatpush1.xpose.msra.mxu0 %v43
  %46 = vmatprep.subr.mxu0 0.0
  %47 = vmatpush1.xpose.msra.mxu0 %v42
  %48 = vmatprep.subr.mxu0 0.0
  %49 = vmatpush1.xpose.msra.mxu0 %v41
  %50 = vmatprep.subr.mxu0 0.0
  %51 = vmatpush1.xpose.msra.mxu0 %v40
  %52 = vmatprep.subr.mxu0 0.0
  %53 = vmatpush1.xpose.msra.mxu0 %v39
  %54 = vmatprep.subr.mxu0 0.0
  %55 = vmatpush1.xpose.msra.mxu0 %v38
  %56 = vmatprep.subr.mxu0 0.0
  %57 = vmatpush1.xpose.msra.mxu0 %v37
  %58 = vmatprep.subr.mxu0 0.0
  %59 = vmatpush1.xpose.msra.mxu0 %v36
  %60 = vmatprep.subr.mxu0 0.0
  %61 = vmatpush1.xpose.msra.mxu0 %v35
  %62 = vmatprep.subr.mxu0 0.0
  %63 = vmatpush1.xpose.msra.mxu0 %v34
  %64 = vmatprep.subr.mxu0 0.0
  %65 = vmatpush1.xpose.msra.mxu0 %v33
  %66 = vmatprep.subr.mxu0 0.0
  %67 = vmatpush1.xpose.msra.mxu0 %v32
  %68 = vmatprep.subr.mxu0 0.0
  %69 = vmatpush1.xpose.msra.mxu0 %v31
  %70 = vmatprep.subr.mxu0 0.0
  %71 = vmatpush1.xpose.msra.mxu0 %v30
  %72 = vmatprep.subr.mxu0 0.0
  %73 = vmatpush1.xpose.msra.mxu0 %v29
  %74 = vmatprep.subr.mxu0 0.0
  %75 = vmatpush1.xpose.msra.mxu0 %v28
  %76 = vmatprep.subr.mxu0 0.0
  %77 = vmatpush2.xpose.msra.mxu0 0.0
  %78 = vmatprep.subr.mxu0 0.0
  %79 = vmatpush2.xpose.msra.mxu0 0.0
  %80 = vmatprep.subr.mxu0 0.0
  %81 = vmatpush2.xpose.msra.mxu0 0.0
  %82 = vmatprep.subr.mxu0 0.0
  %83 = vmatpush2.xpose.msra.mxu0 0.0
  %84 = vmatprep.subr.mxu0 0.0
  %85 = vmatpush2.xpose.msra.mxu0 0.0
  %86 = vmatprep.subr.mxu0 0.0
  %87 = vmatpush2.xpose.msra.mxu0 0.0
  %88 = vmatprep.subr.mxu0 0.0
  %89 = vmatpush2.xpose.msra.mxu0 0.0
  %90 = vmatprep.subr.mxu0 0.0
  %91 = vmatpush2.xpose.msra.mxu0 0.0
  %92 = vmatprep.subr.mxu0 0.0
  %93 = vmatpush2.xpose.msra.mxu0 0.0
  %94 = vmatprep.subr.mxu0 0.0
  %95 = vmatpush2.xpose.msra.mxu0 0.0
  %96 = vmatprep.subr.mxu0 0.0
  %97 = vmatpush2.xpose.msra.mxu0 0.0
  %98 = vmatprep.subr.mxu0 0.0
  %99 = vmatpush2.xpose.msra.mxu0 0.0
  %100 = vmatprep.subr.mxu0 0.0
  %101 = vmatpush2.xpose.msra.mxu0 0.0
  %102 = vmatprep.subr.mxu0 0.0
  %103 = vmatpush2.xpose.msra.mxu0 0.0
  %104 = vmatprep.subr.mxu0 0.0
  %105 = vmatpush2.xpose.msra.mxu0 0.0
  %106 = vmatprep.subr.mxu0 0.0
  %107 = vmatpush2.xpose.msra.mxu0 0.0
  %108 = vmatprep.mubr.f32.mxu0 0.0
  %109 = vmatmul.mubr.f32.gmra.mxu0 %v27
  %v110 = vpop.f32.mrf.mxu0
  %v111 = vadd.f32 0.0, %v110
  %v112 = vpop.f32.mrf.mxu0
  %113 = vdwg.mxu0
  %v114 = vadd.f32 %v26, %v111
  %115 = vst [vmem:[%s3] sm:$0xff] %v114
  // Predicated region
  $region18: #{projection_forward.1} parent=0 // pred_check
    _
  $region19: #{projection_forward.1} parent=0 // pred_check_branch
    %117 = sbr.rel (0) target = $region21
  $region20: #{projection_forward.1} parent=0 // pred_region
    _
  $region21: #{projection_forward.1} parent=0 // pred_fallthru
    _
  // Predicated region
  $region22: #{projection_forward.1} parent=0 // pred_check
    _
  $region23: #{projection_forward.1} parent=0 // pred_check_branch
    %119 = sbr.rel (0) target = $region25
  $region24: #{projection_forward.1} parent=0 // pred_region
    _
  $region25: #{projection_forward.1} parent=0 // pred_fallthru
    _

</llo_original>
